<compile_context>
chip_gen: v7x
topology: tpu7x:2x2x1
jax: 0.10.0
libtpu: 0.0.40
codegen_flags: <defaults>
</compile_context>

<pallas_src>
import math
import functools

import jax
import jax.numpy as jnp
from jax.experimental import pallas as pl
from jax.experimental.pallas import tpu as pltpu


def _round_up(a, b):
    return (a + b - 1) // b * b


@functools.lru_cache(maxsize=1)
def _vmem_capacity_bytes():
    """Physical VMEM per TensorCore; conservative 64 MiB (v7x) fallback is safe everywhere."""
    try:
        info = pltpu.get_tpu_info()
        for attr in ("vmem_capacity_bytes", "vmem_bytes", "vmem_size_bytes"):
            v = getattr(info, attr, None)
            if v:
                return int(v)
    except Exception:
        pass
    return 64 * 2**20


def _make_kernel(d_true, d_pad):
    inv_d = 1.0 / float(d_true)
    gelu_c = math.sqrt(2.0 / math.pi)

    def kernel(x_ref, gamma_ref, beta_ref, w1_ref, b1_ref, w2_ref, b2_ref,
               o_ref, xn_ref):
        k = pl.program_id(1)

        # ---- first hidden block of this row tile: LayerNorm once, seed output with b2 ----
        @pl.when(k == 0)
        def _():
            x = x_ref[...].astype(jnp.float32)
            # mask zero-padded lanes so mean/var use the true d_model
            lane = jax.lax.broadcasted_iota(jnp.int32, (1, d_pad), 1)
            mask = lane < d_true
            mean = jnp.sum(x, axis=-1, keepdims=True) * inv_d
            cen = jnp.where(mask, x - mean, 0.0)
            var = jnp.sum(cen * cen, axis=-1, keepdims=True) * inv_d
            xn = cen * jax.lax.rsqrt(var + 1e-6)
            xn = xn * gamma_ref[...] + beta_ref[...]
            xn_ref[...] = xn.astype(xn_ref.dtype)        # stored in MXU dtype (bf16 default)
            # Output tile stays VMEM-resident across the whole hidden reduction
            # (same block index for every k) -> use it as the accumulator; seeding
            # it with the second bias removes the separate finalize pass.
            o_ref[...] = jnp.broadcast_to(b2_ref[...], o_ref.shape).astype(o_ref.dtype)

        # ---- per hidden chunk: Linear1 -> GELU(tanh) -> Linear2, accumulate into o_ref ----
        h = jnp.dot(xn_ref[...], w1_ref[...],
                    preferred_element_type=jnp.float32) + b1_ref[...]
        g = 0.5 * h * (1.0 + jnp.tanh(gelu_c * (h + 0.044715 * (h * h * h))))
        # TODO(synk): nn.Dropout is identity in eval/inference; train-mode masking not implemented.
        o_ref[...] += jnp.dot(g.astype(w2_ref.dtype), w2_ref[...],
                              preferred_element_type=jnp.float32)

    return kernel


def prepare_ffn_params(gamma, beta, w1, b1, w2, b2, weight_dtype=jnp.bfloat16):
    """Pad (lane-align) + cast parameters ONCE at model init (hoisted off the hot path).

    W1/W2 are cast to `weight_dtype` (bf16 default -> bf16 MXU, halved weight HBM
    traffic/VMEM); LayerNorm params and biases stay float32.
    """
    D, H = w1.shape
    d_pad = _round_up(D, 128)
    h_pad = _round_up(H, 256)        # 256-aligned for v6e/v7x 256x256 MXU tiles
    f32 = jnp.float32
    gamma_p = jnp.pad(jnp.asarray(gamma, f32).reshape(1, D), ((0, 0), (0, d_pad - D)))
    beta_p = jnp.pad(jnp.asarray(beta, f32).reshape(1, D), ((0, 0), (0, d_pad - D)))
    w1_p = jnp.pad(jnp.asarray(w1, f32), ((0, d_pad - D), (0, h_pad - H))).astype(weight_dtype)
    b1_p = jnp.pad(jnp.asarray(b1, f32).reshape(1, H), ((0, 0), (0, h_pad - H)))
    w2_p = jnp.pad(jnp.asarray(w2, f32), ((0, h_pad - H), (0, d_pad - D))).astype(weight_dtype)
    b2_p = jnp.pad(jnp.asarray(b2, f32).reshape(1, D), ((0, 0), (0, d_pad - D)))
    return gamma_p, beta_p, w1_p, b1_p, w2_p, b2_p


@functools.partial(jax.jit, static_argnames=("tile_m", "tile_h"))
def feedforward(x, gamma_p, beta_p, w1_p, b1_p, w2_p, b2_p, *, tile_m=None, tile_h=None):
    """x: (B, S, D) float32; padded params from prepare_ffn_params. Returns (B, S, D) f32."""
    B, S, D = x.shape
    x = x.astype(jnp.float32)
    N = B * S
    d_pad = gamma_p.shape[1]
    h_pad = w1_p.shape[1]

    wbytes = jnp.dtype(w1_p.dtype).itemsize
    xbytes = 4  # f32 activations / output

    # ---- per-generation VMEM budget (v5e/v6e: ~102 MiB, v7x: ~51 MiB) ----
    cap = _vmem_capacity_bytes()
    usable = int(cap * 0.8)          # leave headroom for compiler internal scratch

    # ---- hidden (reduction) tiling: prefer fully VMEM-resident weights so W1/W2
    #      are DMA'd exactly once instead of once per row tile ----
    def _weight_vmem(th):
        # W1 + W2 chunks (double-buffered) + b1 chunk / gamma / beta / b2
        return 2 * wbytes * (2 * d_pad * th) + 4 * (2 * th + 6 * d_pad)

    if tile_h is None:
        for cand in (h_pad, 2048, 1024, 512, 256):
            if cand <= h_pad and h_pad % cand == 0 and _weight_vmem(cand) <= usable // 2:
                tile_h = cand
                break
        else:
            tile_h = 256
    nk = h_pad // tile_h

    # ---- row tiling: big tiles amortize weight streaming + per-step grid overhead ----
    per_row = d_pad * (2 * xbytes + 2 * xbytes + wbytes)  # x dbl-buf + out dbl-buf + xn scratch
    if tile_m is None:
        remaining = max(usable - _weight_vmem(tile_h), usable // 4)
        tile_m = min(1024, max(8, remaining // per_row))
        tile_m = (tile_m // 256) * 256 if tile_m >= 256 else (tile_m // 8) * 8
        tile_m = max(8, tile_m)
        tile_m = min(tile_m, _round_up(N, 8))
        if N > 8:  # keep >= 2 row tiles on the "parallel" axis for v7x megacore
            tile_m = min(tile_m, _round_up(-(-N // 2), 8))
    n_pad = _round_up(N, tile_m)

    x2 = jnp.pad(x.reshape(N, D), ((0, n_pad - N), (0, d_pad - D)))

    vmem_limit = int(min(cap - 4 * 2**20,
                         max(usable, int(1.25 * (_weight_vmem(tile_h) + tile_m * per_row)))))

    kernel = _make_kernel(D, d_pad)

    # Deeper weight prefetch only pays off when the hidden dim is actually blocked.
    w_kwargs = {"pipeline_mode": pl.Buffered(3)} if nk >= 3 else {}

    out_p = pl.pallas_call(
        kernel,
        out_shape=jax.ShapeDtypeStruct((n_pad, d_pad), jnp.float32),
        grid_spec=pltpu.PrefetchScalarGridSpec(
            num_scalar_prefetch=0,
            grid=(n_pad // tile_m, nk),
            in_specs=[
                pl.BlockSpec((tile_m, d_pad), lambda i, k: (i, 0)),              # x rows
                pl.BlockSpec((1, d_pad), lambda i, k: (0, 0)),                   # gamma
                pl.BlockSpec((1, d_pad), lambda i, k: (0, 0)),                   # beta
                pl.BlockSpec((d_pad, tile_h), lambda i, k: (0, k), **w_kwargs),  # W1 chunk
                pl.BlockSpec((1, tile_h), lambda i, k: (0, k)),                  # b1 chunk
                pl.BlockSpec((tile_h, d_pad), lambda i, k: (k, 0), **w_kwargs),  # W2 chunk
                pl.BlockSpec((1, d_pad), lambda i, k: (0, 0)),                   # b2
            ],
            out_specs=pl.BlockSpec((tile_m, d_pad), lambda i, k: (i, 0)),
            scratch_shapes=[
                pltpu.VMEM((tile_m, d_pad), w1_p.dtype),   # LayerNorm result in MXU dtype
            ],
        ),
        compiler_params=pltpu.CompilerParams(
            dimension_semantics=("parallel", "arbitrary"),
            vmem_limit_bytes=vmem_limit,
        ),
    )(x2, gamma_p, beta_p, w1_p, b1_p, w2_p, b2_p)

    return out_p[:N, :D].reshape(B, S, D)


def reference(x, gamma, beta, w1, b1, w2, b2):
    mu = jnp.mean(x, axis=-1, keepdims=True)
    var = jnp.mean((x - mu) ** 2, axis=-1, keepdims=True)
    xn = (x - mu) / jnp.sqrt(var + 1e-6) * gamma[0] + beta[0]
    h = xn @ w1 + b1[0]
    c = math.sqrt(2.0 / math.pi)
    g = 0.5 * h * (1.0 + jnp.tanh(c * (h + 0.044715 * h ** 3)))
    return g @ w2 + b2[0]


if __name__ == "__main__":
    key = jax.random.PRNGKey(0)
    B, S, D = 2, 8, 32  # batch=2, seq=8, d_model=32

    k_x, k_g, k_bt, k_w1, k_b1, k_w2, k_b2 = jax.random.split(key, 7)
    x = jax.random.normal(k_x, (B, S, D), dtype=jnp.float32)

    # Synthetic parameters matching the module __init__ shapes:
    gamma = 1.0 + 0.1 * jax.random.normal(k_g, (1, D), dtype=jnp.float32)   # LayerNorm weight
    beta = 0.1 * jax.random.normal(k_bt, (1, D), dtype=jnp.float32)         # LayerNorm bias
    # Linear(d_model, 2*d_model) and Linear(2*d_model, d_model), stored (in, out).
    w1 = jax.random.normal(k_w1, (D, 2 * D), dtype=jnp.float32) * (1.0 / math.sqrt(D))
    b1 = jax.random.normal(k_b1, (1, 2 * D), dtype=jnp.float32) * 0.01
    w2 = jax.random.normal(k_w2, (2 * D, D), dtype=jnp.float32) * (1.0 / math.sqrt(2 * D))
    b2 = jax.random.normal(k_b2, (1, D), dtype=jnp.float32) * 0.01

    ref = reference(x, gamma, beta, w1, b1, w2, b2)

    # Default performance path: bf16 weights / bf16 MXU with f32 accumulation.
    params_bf16 = prepare_ffn_params(gamma, beta, w1, b1, w2, b2, weight_dtype=jnp.bfloat16)
    out = jax.block_until_ready(feedforward(x, *params_bf16))
    assert out.shape == (B, S, D)
    assert jnp.allclose(out, ref, atol=3e-2, rtol=3e-2), "bf16 path mismatch vs reference"

    # Full-precision path: verifies the fused kernel matches the module semantics exactly.
    params_f32 = prepare_ffn_params(gamma, beta, w1, b1, w2, b2, weight_dtype=jnp.float32)
    out32 = jax.block_until_ready(feedforward(x, *params_f32))
    assert jnp.allclose(out32, ref, atol=1e-4, rtol=1e-4), "f32 path mismatch vs reference"

    print("KERNEL_OK")
</pallas_src>

<mosaic_0001>
module attributes {stable_mosaic.version = 11 : i64} {
  func.func @kernel(%arg0: i32, %arg1: i32, %arg2: memref<8x128xf32, #tpu.memory_space<vmem>>, %arg3: memref<1x128xf32, #tpu.memory_space<vmem>>, %arg4: memref<1x128xf32, #tpu.memory_space<vmem>>, %arg5: memref<128x256xbf16, #tpu.memory_space<vmem>>, %arg6: memref<1x256xf32, #tpu.memory_space<vmem>>, %arg7: memref<256x128xbf16, #tpu.memory_space<vmem>>, %arg8: memref<1x128xf32, #tpu.memory_space<vmem>>, %arg9: memref<8x128xf32, #tpu.memory_space<vmem>>, %arg10: memref<8x128xbf16, #tpu.memory_space<vmem>>) attributes {dimension_semantics = [#tpu.dimension_semantics<parallel>, #tpu.dimension_semantics<arbitrary>], iteration_bounds = array<i64: 2, 1>, scalar_prefetch = 0 : i64, scratch_operands = 1 : i64, tpu.core_type = #tpu.core_type<tc>, window_params = [{transform_indices = @transform_0, window_bounds = array<i64: 8, 128>}, {pipeline_mode = #tpu.pipeline_mode<synchronous>, transform_indices = @transform_1, window_bounds = array<i64: 1, 128>}, {pipeline_mode = #tpu.pipeline_mode<synchronous>, transform_indices = @transform_2, window_bounds = array<i64: 1, 128>}, {transform_indices = @transform_3, window_bounds = array<i64: 128, 256>}, {transform_indices = @transform_4, window_bounds = array<i64: 1, 256>}, {transform_indices = @transform_5, window_bounds = array<i64: 256, 128>}, {pipeline_mode = #tpu.pipeline_mode<synchronous>, transform_indices = @transform_6, window_bounds = array<i64: 1, 128>}, {transform_indices = @transform_7, window_bounds = array<i64: 8, 128>}]} {
    %c0_i32 = arith.constant 0 : i32
    %0 = arith.cmpi eq, %arg1, %c0_i32 : i32
    %1 = arith.extui %0 : i1 to i32
    %c0_i32_0 = arith.constant 0 : i32
    %2 = arith.cmpi ne, %1, %c0_i32_0 : i32
    scf.if %2 {
      %c0_17 = arith.constant 0 : index
      %c0_18 = arith.constant 0 : index
      %28 = vector.load %arg2[%c0_17, %c0_18] : memref<8x128xf32, #tpu.memory_space<vmem>>, vector<8x128xf32>
      %29 = tpu.iota {dimensions = array<i32: 1>} : vector<1x128xi32>
      %c32_i32 = arith.constant 32 : i32
      %30 = vector.broadcast %c32_i32 : i32 to vector<1x128xi32>
      %31 = arith.cmpi slt, %29, %30 : vector<1x128xi32>
      %cst_19 = arith.constant dense<0.000000e+00> : vector<8xf32>
      %32 = vector.multi_reduction <add>, %28, %cst_19 [1] : vector<8x128xf32> to vector<8xf32>
      %33 = vector.shape_cast %32 : vector<8xf32> to vector<8x1xf32>
      %cst_20 = arith.constant 3.125000e-02 : f32
      %34 = vector.broadcast %cst_20 : f32 to vector<8x1xf32>
      %35 = arith.mulf %33, %34 : vector<8x1xf32>
      %36 = vector.broadcast %35 : vector<8x1xf32> to vector<8x128xf32>
      %37 = arith.subf %28, %36 : vector<8x128xf32>
      %cst_21 = arith.constant 0.000000e+00 : f32
      %38 = vector.shape_cast %31 : vector<1x128xi1> to vector<1x128xi1>
      %39 = vector.broadcast %38 : vector<1x128xi1> to vector<8x128xi1>
      %40 = vector.broadcast %cst_21 : f32 to vector<8x128xf32>
      %41 = arith.select %39, %37, %40 : vector<8x128xi1>, vector<8x128xf32>
      %42 = arith.mulf %41, %41 : vector<8x128xf32>
      %cst_22 = arith.constant dense<0.000000e+00> : vector<8xf32>
      %43 = vector.multi_reduction <add>, %42, %cst_22 [1] : vector<8x128xf32> to vector<8xf32>
      %44 = vector.shape_cast %43 : vector<8xf32> to vector<8x1xf32>
      %cst_23 = arith.constant 3.125000e-02 : f32
      %45 = vector.broadcast %cst_23 : f32 to vector<8x1xf32>
      %46 = arith.mulf %44, %45 : vector<8x1xf32>
      %cst_24 = arith.constant 9.99999997E-7 : f32
      %47 = vector.broadcast %cst_24 : f32 to vector<8x1xf32>
      %48 = arith.addf %46, %47 : vector<8x1xf32>
      %49 = math.rsqrt %48 : vector<8x1xf32>
      %50 = vector.broadcast %49 : vector<8x1xf32> to vector<8x128xf32>
      %51 = arith.mulf %41, %50 : vector<8x128xf32>
      %c0_25 = arith.constant 0 : index
      %c0_26 = arith.constant 0 : index
      %52 = vector.load %arg3[%c0_25, %c0_26] : memref<1x128xf32, #tpu.memory_space<vmem>>, vector<1x128xf32>
      %53 = vector.broadcast %52 : vector<1x128xf32> to vector<8x128xf32>
      %54 = arith.mulf %51, %53 : vector<8x128xf32>
      %c0_27 = arith.constant 0 : index
      %c0_28 = arith.constant 0 : index
      %55 = vector.load %arg4[%c0_27, %c0_28] : memref<1x128xf32, #tpu.memory_space<vmem>>, vector<1x128xf32>
      %56 = vector.broadcast %55 : vector<1x128xf32> to vector<8x128xf32>
      %57 = arith.addf %54, %56 : vector<8x128xf32>
      %58 = arith.truncf %57 : vector<8x128xf32> to vector<8x128xbf16>
      %c0_29 = arith.constant 0 : index
      %c0_30 = arith.constant 0 : index
      %59 = vector.load %arg10[%c0_29, %c0_30] : memref<8x128xbf16, #tpu.memory_space<vmem>>, vector<8x128xbf16>
      tpu.vector_store %arg10[%c0_29, %c0_30], %58 {strides = array<i32>} : memref<8x128xbf16, #tpu.memory_space<vmem>>, vector<8x128xbf16>,
      %c0_31 = arith.constant 0 : index
      %c0_32 = arith.constant 0 : index
      %60 = vector.load %arg8[%c0_31, %c0_32] : memref<1x128xf32, #tpu.memory_space<vmem>>, vector<1x128xf32>
      %61 = vector.shape_cast %60 : vector<1x128xf32> to vector<1x128xf32>
      %62 = vector.broadcast %61 : vector<1x128xf32> to vector<8x128xf32>
      %c0_33 = arith.constant 0 : index
      %c0_34 = arith.constant 0 : index
      %63 = vector.load %arg9[%c0_33, %c0_34] : memref<8x128xf32, #tpu.memory_space<vmem>>, vector<8x128xf32>
      tpu.vector_store %arg9[%c0_33, %c0_34], %62 {strides = array<i32>} : memref<8x128xf32, #tpu.memory_space<vmem>>, vector<8x128xf32>,
    } else {
    }
    %c0 = arith.constant 0 : index
    %c0_1 = arith.constant 0 : index
    %3 = vector.load %arg10[%c0, %c0_1] : memref<8x128xbf16, #tpu.memory_space<vmem>>, vector<8x128xbf16>
    %c0_2 = arith.constant 0 : index
    %c0_3 = arith.constant 0 : index
    %4 = vector.load %arg5[%c0_2, %c0_3] : memref<128x256xbf16, #tpu.memory_space<vmem>>, vector<128x256xbf16>
    %cst = arith.constant dense<0.000000e+00> : vector<8x256xf32>
    %5 = tpu.matmul %3, %4, %cst {dimension_numbers = #tpu.dot_dimension_numbers<[1], [0], [0], [1], [0, 0, 1, 1], [], []>} : vector<8x128xbf16>, vector<128x256xbf16>, vector<8x256xf32> -> vector<8x256xf32>
    %c0_4 = arith.constant 0 : index
    %c0_5 = arith.constant 0 : index
    %6 = vector.load %arg6[%c0_4, %c0_5] : memref<1x256xf32, #tpu.memory_space<vmem>>, vector<1x256xf32>
    %7 = vector.broadcast %6 : vector<1x256xf32> to vector<8x256xf32>
    %8 = arith.addf %5, %7 : vector<8x256xf32>
    %cst_6 = arith.constant 5.000000e-01 : f32
    %9 = vector.broadcast %cst_6 : f32 to vector<8x256xf32>
    %10 = arith.mulf %9, %8 : vector<8x256xf32>
    %11 = arith.mulf %8, %8 : vector<8x256xf32>
    %12 = arith.mulf %11, %8 : vector<8x256xf32>
    %cst_7 = arith.constant 4.471500e-02 : f32
    %13 = vector.broadcast %cst_7 : f32 to vector<8x256xf32>
    %14 = arith.mulf %13, %12 : vector<8x256xf32>
    %15 = arith.addf %8, %14 : vector<8x256xf32>
    %cst_8 = arith.constant 0.797884583 : f32
    %16 = vector.broadcast %cst_8 : f32 to vector<8x256xf32>
    %17 = arith.mulf %16, %15 : vector<8x256xf32>
    %18 = math.tanh %17 : vector<8x256xf32>
    %cst_9 = arith.constant 1.000000e+00 : f32
    %19 = vector.broadcast %cst_9 : f32 to vector<8x256xf32>
    %20 = arith.addf %19, %18 : vector<8x256xf32>
    %21 = arith.mulf %10, %20 : vector<8x256xf32>
    %c0_10 = arith.constant 0 : index
    %c0_11 = arith.constant 0 : index
    %22 = vector.load %arg9[%c0_10, %c0_11] : memref<8x128xf32, #tpu.memory_space<vmem>>, vector<8x128xf32>
    %23 = arith.truncf %21 : vector<8x256xf32> to vector<8x256xbf16>
    %c0_12 = arith.constant 0 : index
    %c0_13 = arith.constant 0 : index
    %24 = vector.load %arg7[%c0_12, %c0_13] : memref<256x128xbf16, #tpu.memory_space<vmem>>, vector<256x128xbf16>
    %cst_14 = arith.constant dense<0.000000e+00> : vector<8x128xf32>
    %25 = tpu.matmul %23, %24, %cst_14 {dimension_numbers = #tpu.dot_dimension_numbers<[1], [0], [0], [1], [0, 0, 1, 1], [], []>} : vector<8x256xbf16>, vector<256x128xbf16>, vector<8x128xf32> -> vector<8x128xf32>
    %26 = arith.addf %22, %25 : vector<8x128xf32>
    %c0_15 = arith.constant 0 : index
    %c0_16 = arith.constant 0 : index
    %27 = vector.load %arg9[%c0_15, %c0_16] : memref<8x128xf32, #tpu.memory_space<vmem>>, vector<8x128xf32>
    tpu.vector_store %arg9[%c0_15, %c0_16], %26 {strides = array<i32>} : memref<8x128xf32, #tpu.memory_space<vmem>>, vector<8x128xf32>,
    return
  }
  func.func @transform_0(%arg0: i32, %arg1: i32) -> (i32, i32) {
    %c0_i32 = arith.constant 0 : i32
    %c0_i32_0 = arith.constant 0 : i32
    return %arg0, %c0_i32 : i32, i32
  }
  func.func @transform_1(%arg0: i32, %arg1: i32) -> (i32, i32) {
    %c0_i32 = arith.constant 0 : i32
    %c0_i32_0 = arith.constant 0 : i32
    %c0_i32_1 = arith.constant 0 : i32
    return %c0_i32, %c0_i32_0 : i32, i32
  }
  func.func @transform_2(%arg0: i32, %arg1: i32) -> (i32, i32) {
    %c0_i32 = arith.constant 0 : i32
    %c0_i32_0 = arith.constant 0 : i32
    %c0_i32_1 = arith.constant 0 : i32
    return %c0_i32, %c0_i32_0 : i32, i32
  }
  func.func @transform_3(%arg0: i32, %arg1: i32) -> (i32, i32) {
    %c0_i32 = arith.constant 0 : i32
    %c0_i32_0 = arith.constant 0 : i32
    return %c0_i32, %arg1 : i32, i32
  }
  func.func @transform_4(%arg0: i32, %arg1: i32) -> (i32, i32) {
    %c0_i32 = arith.constant 0 : i32
    %c0_i32_0 = arith.constant 0 : i32
    return %c0_i32, %arg1 : i32, i32
  }
  func.func @transform_5(%arg0: i32, %arg1: i32) -> (i32, i32) {
    %c0_i32 = arith.constant 0 : i32
    %c0_i32_0 = arith.constant 0 : i32
    return %arg1, %c0_i32 : i32, i32
  }
  func.func @transform_6(%arg0: i32, %arg1: i32) -> (i32, i32) {
    %c0_i32 = arith.constant 0 : i32
    %c0_i32_0 = arith.constant 0 : i32
    %c0_i32_1 = arith.constant 0 : i32
    return %c0_i32, %c0_i32_0 : i32, i32
  }
  func.func @transform_7(%arg0: i32, %arg1: i32) -> (i32, i32) {
    %c0_i32 = arith.constant 0 : i32
    %c0_i32_0 = arith.constant 0 : i32
    return %arg0, %c0_i32 : i32, i32
  }
}

</mosaic_0001>

<llo_original>
// kernel: feedforward.1
$region0: #{feedforward.1}
  #allocation0 [shape = 'u32[]', space=smem, size = 0x4, offset = 0x4, fixed_abs, tag = 'smem constant byte address 0x4 - core index']
  #allocation1 [shape = 'u32[144,128]{1,0:T(1,128)}', space=vmem, size = 0x12000, scoped, tag = 'internal scratch']
  #allocation2 [shape = 'bf16[8,128]{1,0:T(8,128)(2,1)}', space=vmem, size = 0x800, scoped, tag = 'scratch operand']
  %s0 = inlined_call_operand.vmem [shape: f32[16,128], index: 0, kind: input, shape index: {}]
  %s1 = inlined_call_operand.vmem [shape: f32[1,128], index: 1, kind: input, shape index: {}]
  %s2 = inlined_call_operand.vmem [shape: f32[1,128], index: 2, kind: input, shape index: {}]
  %s3 = inlined_call_operand.hbm [shape: bf16[128,256], index: 3, kind: input, shape index: {}]
  %s4 = inlined_call_operand.vmem [shape: f32[1,256], index: 4, kind: input, shape index: {}]
  %s5 = inlined_call_operand.hbm [shape: bf16[256,128], index: 5, kind: input, shape index: {}]
  %s6 = inlined_call_operand.vmem [shape: f32[1,128], index: 6, kind: input, shape index: {}]
  %s7 = inlined_call_operand.vmem [shape: f32[16,128], index: 7, kind: output, shape index: {}]
  %s8 = sld [smem:[#allocation0]]
  $region73: #{feedforward.1} parent=0
    _
  %s10 = ssub.s32 1, %s8
  %s11 = scalar_select 0, %s10, %s8
  $region1: #{feedforward.1} parent=0
    #allocation3 [shape = 'u8[65536]{0}', space=vmem, size = 0x10000, scoped, tag = 'input window, operand 3, single buffered']
    #allocation4 [shape = 's32[2]{0}', space=sflag, size = 0x8, scoped, tag = 'scoped memory for feedforward.1']
    #allocation5 [shape = 'u8[65536]{0}', space=vmem, size = 0x10000, scoped, tag = 'input window, operand 5, single buffered']
    #allocation6 [shape = 's32[1]{0}', space=sflag, size = 0x4, scoped, tag = 'scoped memory for feedforward.1']
    %12 = vsyncpa [#allocation4], 0
    %13 = vsyncpa [#allocation6], 0
    loop: start=0, step=1, limit=4
    $region2: #{feedforward.1} parent=1 // loop_pre_header
      _
    $region3: #{feedforward.1} parent=1 // loop_header
      %s15 = sphi 0, %s19
      %p16 = scmp.ge.s32.totalorder %s15, 4
      %s22 = sphi 0, %s34
      %s23 = sphi 0, %s30
      %s24 = sphi 0, %s22
      %s25 = sphi 0, %s23
      %s26 = sphi 0, %s24
      %s27 = sphi 0, %s25
      %s37 = sphi 0, %s39
      %s40 = sphi 0, %s37
      %s41 = sphi 0, %s40
      %s57 = sphi 0, %s41
      %s61 = sphi 0, %s61
      %s63 = sphi 0, %s61
      %s64 = sphi 0, %s63
      %s78 = sphi 0, %s64
      %s82 = sphi 0, %s82
      %s84 = sphi 0, %s82
      %s85 = sphi 0, %s84
      %s99 = sphi 0, %s85
      %s105 = sphi 0, %s107
      %s108 = sphi 0, %s105
      %s109 = sphi 0, %s108
      %s125 = sphi 0, %s109
      %s131 = sphi 0, %s133
      %s134 = sphi 0, %s131
      %s135 = sphi 0, %s134
      %s151 = sphi 0, %s135
      %s157 = sphi 0, %s159
      %s160 = sphi 0, %s157
      %s161 = sphi 0, %s160
      %s177 = sphi 0, %s161
      %s181 = sphi 0, %s181
      %s183 = sphi 0, %s181
      %s184 = sphi 0, %s183
      %s198 = sphi 0, %s184
      %s204 = sphi 0, %s206
      %s207 = sphi 0, %s204
      %s208 = sphi 0, %s207
      %s224 = sphi 0, %s208
    $region4: #{feedforward.1} parent=1 // loop_header_branch
      %18 = sbr.rel (%p16) target = $region8
    $region5: #{feedforward.1} parent=1 // loop_body
      %s20 = ssub.s32 %s15, 1
      %s21 = ssub.s32 %s15, 2
      %s28 = sadd.s32 1, %s23
      %p29 = scmp.ge.s32.totalorder %s28, 1
      %s30 = scalar_select %p29, 0, %s28
      %s31 = sadd.s32 1, %s22
      %s32 = scalar_select %p29, %s31, %s22
      %p33 = scmp.ge.s32.totalorder %s32, 2
      %s34 = scalar_select %p33, 0, %s32
      %s35 = ssub.s32 %s22, %s34
      %p36 = scmp.eq.s32.totalorder %s35, 0
      %s38 = sadd.s32 %s37, 1
      %s39 = scalar_select %p36, %s37, %s38
      %p42 = pneg %p36
      %p43 = scmp.eq.s32.totalorder %s15, 1
      %p44 = por %p42, %p43
      %p45 = scmp.ne.s32.totalorder %s37, %s40
      %p46 = scmp.eq.s32.totalorder %s15, 0
      %p47 = por %p45, %p46
      %p48 = scmp.ne.s32.totalorder %s37, %s40
      %p49 = scmp.eq.s32.totalorder %s20, 1
      %p50 = por %p48, %p49
      %p51 = scmp.ne.s32.totalorder %s40, %s41
      %p52 = scmp.eq.s32.totalorder %s20, 0
      %p53 = por %p51, %p52
      %p54 = scmp.ne.s32.totalorder %s40, %s41
      %p55 = scmp.eq.s32.totalorder %s21, 1
      %p56 = por %p54, %p55
      %p58 = scmp.ne.s32.totalorder %s41, %s57
      %p59 = scmp.eq.s32.totalorder %s21, 0
      %p60 = por %p58, %p59
      %s62 = sadd.s32 %s61, 1
      %p65 = scmp.eq.s32.totalorder %s15, 1
      %p66 = scmp.ne.s32.totalorder %s61, %s63
      %p67 = scmp.eq.s32.totalorder %s15, 0
      %p68 = por %p66, %p67
      %p69 = scmp.ne.s32.totalorder %s61, %s63
      %p70 = scmp.eq.s32.totalorder %s20, 1
      %p71 = por %p69, %p70
      %p72 = scmp.ne.s32.totalorder %s63, %s64
      %p73 = scmp.eq.s32.totalorder %s20, 0
      %p74 = por %p72, %p73
      %p75 = scmp.ne.s32.totalorder %s63, %s64
      %p76 = scmp.eq.s32.totalorder %s21, 1
      %p77 = por %p75, %p76
      %p79 = scmp.ne.s32.totalorder %s64, %s78
      %p80 = scmp.eq.s32.totalorder %s21, 0
      %p81 = por %p79, %p80
      %s83 = sadd.s32 %s82, 1
      %p86 = scmp.eq.s32.totalorder %s15, 1
      %p87 = scmp.ne.s32.totalorder %s82, %s84
      %p88 = scmp.eq.s32.totalorder %s15, 0
      %p89 = por %p87, %p88
      %p90 = scmp.ne.s32.totalorder %s82, %s84
      %p91 = scmp.eq.s32.totalorder %s20, 1
      %p92 = por %p90, %p91
      %p93 = scmp.ne.s32.totalorder %s84, %s85
      %p94 = scmp.eq.s32.totalorder %s20, 0
      %p95 = por %p93, %p94
      %p96 = scmp.ne.s32.totalorder %s84, %s85
      %p97 = scmp.eq.s32.totalorder %s21, 1
      %p98 = por %p96, %p97
      %p100 = scmp.ne.s32.totalorder %s85, %s99
      %p101 = scmp.eq.s32.totalorder %s21, 0
      %p102 = por %p100, %p101
      %s103 = ssub.s32 %s23, %s30
      %p104 = scmp.eq.s32.totalorder %s103, 0
      %s106 = sadd.s32 %s105, 1
      %s107 = scalar_select %p104, %s105, %s106
      %p110 = pneg %p104
      %p111 = scmp.eq.s32.totalorder %s15, 1
      %p112 = por %p110, %p111
      %p113 = scmp.ne.s32.totalorder %s105, %s108
      %p114 = scmp.eq.s32.totalorder %s15, 0
      %p115 = por %p113, %p114
      %p116 = scmp.ne.s32.totalorder %s105, %s108
      %p117 = scmp.eq.s32.totalorder %s20, 1
      %p118 = por %p116, %p117
      %p119 = scmp.ne.s32.totalorder %s108, %s109
      %p120 = scmp.eq.s32.totalorder %s20, 0
      %p121 = por %p119, %p120
      %p122 = scmp.ne.s32.totalorder %s108, %s109
      %p123 = scmp.eq.s32.totalorder %s21, 1
      %p124 = por %p122, %p123
      %p126 = scmp.ne.s32.totalorder %s109, %s125
      %p127 = scmp.eq.s32.totalorder %s21, 0
      %p128 = por %p126, %p127
      %s129 = ssub.s32 %s23, %s30
      %p130 = scmp.eq.s32.totalorder %s129, 0
      %s132 = sadd.s32 %s131, 1
      %s133 = scalar_select %p130, %s131, %s132
      %p136 = pneg %p130
      %p137 = scmp.eq.s32.totalorder %s15, 1
      %p138 = por %p136, %p137
      %p139 = scmp.ne.s32.totalorder %s131, %s134
      %p140 = scmp.eq.s32.totalorder %s15, 0
      %p141 = por %p139, %p140
      %p142 = scmp.ne.s32.totalorder %s131, %s134
      %p143 = scmp.eq.s32.totalorder %s20, 1
      %p144 = por %p142, %p143
      %p145 = scmp.ne.s32.totalorder %s134, %s135
      %p146 = scmp.eq.s32.totalorder %s20, 0
      %p147 = por %p145, %p146
      %p148 = scmp.ne.s32.totalorder %s134, %s135
      %p149 = scmp.eq.s32.totalorder %s21, 1
      %p150 = por %p148, %p149
      %p152 = scmp.ne.s32.totalorder %s135, %s151
      %p153 = scmp.eq.s32.totalorder %s21, 0
      %p154 = por %p152, %p153
      %s155 = ssub.s32 %s23, %s30
      %p156 = scmp.eq.s32.totalorder %s155, 0
      %s158 = sadd.s32 %s157, 1
      %s159 = scalar_select %p156, %s157, %s158
      %p162 = pneg %p156
      %p163 = scmp.eq.s32.totalorder %s15, 1
      %p164 = por %p162, %p163
      %p165 = scmp.ne.s32.totalorder %s157, %s160
      %p166 = scmp.eq.s32.totalorder %s15, 0
      %p167 = por %p165, %p166
      %p168 = scmp.ne.s32.totalorder %s157, %s160
      %p169 = scmp.eq.s32.totalorder %s20, 1
      %p170 = por %p168, %p169
      %p171 = scmp.ne.s32.totalorder %s160, %s161
      %p172 = scmp.eq.s32.totalorder %s20, 0
      %p173 = por %p171, %p172
      %p174 = scmp.ne.s32.totalorder %s160, %s161
      %p175 = scmp.eq.s32.totalorder %s21, 1
      %p176 = por %p174, %p175
      %p178 = scmp.ne.s32.totalorder %s161, %s177
      %p179 = scmp.eq.s32.totalorder %s21, 0
      %p180 = por %p178, %p179
      %s182 = sadd.s32 %s181, 1
      %p185 = scmp.eq.s32.totalorder %s15, 1
      %p186 = scmp.ne.s32.totalorder %s181, %s183
      %p187 = scmp.eq.s32.totalorder %s15, 0
      %p188 = por %p186, %p187
      %p189 = scmp.ne.s32.totalorder %s181, %s183
      %p190 = scmp.eq.s32.totalorder %s20, 1
      %p191 = por %p189, %p190
      %p192 = scmp.ne.s32.totalorder %s183, %s184
      %p193 = scmp.eq.s32.totalorder %s20, 0
      %p194 = por %p192, %p193
      %p195 = scmp.ne.s32.totalorder %s183, %s184
      %p196 = scmp.eq.s32.totalorder %s21, 1
      %p197 = por %p195, %p196
      %p199 = scmp.ne.s32.totalorder %s184, %s198
      %p200 = scmp.eq.s32.totalorder %s21, 0
      %p201 = por %p199, %p200
      %s202 = ssub.s32 %s22, %s34
      %p203 = scmp.eq.s32.totalorder %s202, 0
      %s205 = sadd.s32 %s204, 1
      %s206 = scalar_select %p203, %s204, %s205
      %p209 = pneg %p203
      %p210 = scmp.eq.s32.totalorder %s15, 1
      %p211 = por %p209, %p210
      %p212 = scmp.ne.s32.totalorder %s204, %s207
      %p213 = scmp.eq.s32.totalorder %s15, 0
      %p214 = por %p212, %p213
      %p215 = scmp.ne.s32.totalorder %s204, %s207
      %p216 = scmp.eq.s32.totalorder %s20, 1
      %p217 = por %p215, %p216
      %p218 = scmp.ne.s32.totalorder %s207, %s208
      %p219 = scmp.eq.s32.totalorder %s20, 0
      %p220 = por %p218, %p219
      %p221 = scmp.ne.s32.totalorder %s207, %s208
      %p222 = scmp.eq.s32.totalorder %s21, 1
      %p223 = por %p221, %p222
      %p225 = scmp.ne.s32.totalorder %s208, %s224
      %p226 = scmp.eq.s32.totalorder %s21, 0
      %p227 = por %p225, %p226
      %p228 = scmp.le.s32.totalorder 1, %s15
      %p229 = scmp.lt.s32.totalorder %s15, 3
      %p230 = pnand %p228, %p229
      %p231 = pneg %p230
      // Predicated region
      $region9: #{feedforward.1} parent=5 // pred_check
        _
      $region10: #{feedforward.1} parent=5 // pred_check_branch
        %233 = sbr.rel (%p230) target = $region12
      $region11: #{feedforward.1} parent=5 // pred_region
        %s234 = ssub.s32 %s15, 1
        // Predicated region
        $region13: #{feedforward.1} parent=11 // pred_check
          %p235 = pneg %p74
        $region14: #{feedforward.1} parent=11 // pred_check_branch
          %237 = sbr.rel (%p235) target = $region16
        $region15: #{feedforward.1} parent=11 // pred_region
          _
        $region16: #{feedforward.1} parent=11 // pred_fallthru
          _
        // Predicated region
        $region17: #{feedforward.1} parent=11 // pred_check
          %p238 = pneg %p95
        $region18: #{feedforward.1} parent=11 // pred_check_branch
          %240 = sbr.rel (%p238) target = $region20
        $region19: #{feedforward.1} parent=11 // pred_region
          _
        $region20: #{feedforward.1} parent=11 // pred_fallthru
          _
        // Predicated region
        $region21: #{feedforward.1} parent=11 // pred_check
          %p241 = pneg %p121
        $region22: #{feedforward.1} parent=11 // pred_check_branch
          %243 = sbr.rel (%p241) target = $region24
        $region23: #{feedforward.1} parent=11 // pred_region
          %s244 = smul.u32 2, %s25
          %s246 = ssub.s32 2048, 2048
          %247 = vsyncadd [#allocation4], %s246
          %s248 = smul.addr %s244, 64
          %s249 = scalar_lea.hbm %s3, %s248
          %s250 = sshll.u32 [#allocation3], 4
          %s251 = int_to_ptr.vmem [resolvable:$true] %s250
          %256 = dma.hbm_to_vmem [thread:$0]  %s249, 2048, %s251, [#allocation4], 128, 128, 8
        $region24: #{feedforward.1} parent=11 // pred_fallthru
          _
        // Predicated region
        $region25: #{feedforward.1} parent=11 // pred_check
          %p257 = pneg %p147
        $region26: #{feedforward.1} parent=11 // pred_check_branch
          %259 = sbr.rel (%p257) target = $region28
        $region27: #{feedforward.1} parent=11 // pred_region
          %s260 = smul.u32 2, %s25
          %p261 = scmp.lt.s32.totalorder %s260, 1
          %s262 = scalar_select %p261, %s260, 1
          %s263 = scalar_lea.vmem %s4, %s262
          %s264 = smul.u32 2, %s25
        $region28: #{feedforward.1} parent=11 // pred_fallthru
          _
        // Predicated region
        $region29: #{feedforward.1} parent=11 // pred_check
          %p265 = pneg %p173
        $region30: #{feedforward.1} parent=11 // pred_check_branch
          %267 = sbr.rel (%p265) target = $region32
        $region31: #{feedforward.1} parent=11 // pred_region
          %s268 = smul.u32 32, %s25
          %s270 = ssub.s32 2048, 2048
          %271 = vsyncadd [#allocation6], %s270
          %s272 = smul.addr %s268, 64
          %s273 = scalar_lea.hbm %s5, %s272
          %s274 = sshll.u32 [#allocation5], 4
          %s275 = int_to_ptr.vmem [resolvable:$true] %s274
          %280 = dma.hbm_to_vmem [thread:$0]  %s273, 2048, %s275, [#allocation6], 64, 64, 4
        $region32: #{feedforward.1} parent=11 // pred_fallthru
          _
        // Predicated region
        $region33: #{feedforward.1} parent=11 // pred_check
          %p281 = pneg %p194
        $region34: #{feedforward.1} parent=11 // pred_check_branch
          %283 = sbr.rel (%p281) target = $region36
        $region35: #{feedforward.1} parent=11 // pred_region
          _
        $region36: #{feedforward.1} parent=11 // pred_fallthru
          _
      $region12: #{feedforward.1} parent=5 // pred_fallthru
        _
      %p284 = scmp.lt.s32.totalorder %s15, 2
      // Predicated region
      $region37: #{feedforward.1} parent=5 // pred_check
        %p285 = pneg %p284
      $region38: #{feedforward.1} parent=5 // pred_check_branch
        %287 = sbr.rel (%p285) target = $region40
      $region39: #{feedforward.1} parent=5 // pred_region
        // Predicated region
        $region41: #{feedforward.1} parent=39 // pred_check
          %p288 = pneg %p47
        $region42: #{feedforward.1} parent=39 // pred_check_branch
          %290 = sbr.rel (%p288) target = $region44
        $region43: #{feedforward.1} parent=39 // pred_region
          %p291 = scmp.lt.s32.totalorder %s22, 1
          %s292 = scalar_select %p291, %s22, 1
          %s293 = smul.addr %s292, 8
          %s294 = scalar_lea.vmem %s0, %s293
        $region44: #{feedforward.1} parent=39 // pred_fallthru
          _
      $region40: #{feedforward.1} parent=5 // pred_fallthru
        _
      %p295 = scmp.le.s32.totalorder 1, %s15
      %p296 = scmp.lt.s32.totalorder %s15, 3
      %p297 = pnand %p295, %p296
      %p298 = pneg %p297
      // Predicated region
      $region45: #{feedforward.1} parent=5 // pred_check
        _
      $region46: #{feedforward.1} parent=5 // pred_check_branch
        %300 = sbr.rel (%p297) target = $region48
      $region47: #{feedforward.1} parent=5 // pred_region
        %s301 = ssub.s32 %s15, 1
        // Predicated region
        $region49: #{feedforward.1} parent=47 // pred_check
          %p302 = pneg %p121
        $region50: #{feedforward.1} parent=47 // pred_check_branch
          %304 = sbr.rel (%p302) target = $region52
        $region51: #{feedforward.1} parent=47 // pred_region
          %305 = dma.done [#allocation4], 2048
        $region52: #{feedforward.1} parent=47 // pred_fallthru
          _
        // Predicated region
        $region53: #{feedforward.1} parent=47 // pred_check
          %p306 = pneg %p173
        $region54: #{feedforward.1} parent=47 // pred_check_branch
          %308 = sbr.rel (%p306) target = $region56
        $region55: #{feedforward.1} parent=47 // pred_region
          %309 = dma.done [#allocation6], 2048
        $region56: #{feedforward.1} parent=47 // pred_fallthru
          _
        %p310 = scmp.lt.s32.totalorder %s24, 1
        %s311 = scalar_select %p310, %s24, 1
        %s312 = smul.addr %s311, 8
        %s313 = scalar_lea.vmem %s0, %s312
        %p314 = pneg %p53
        %p315 = pneg %p50
        %p316 = pneg %p74
        %p317 = pneg %p71
        %p318 = pneg %p95
        %p319 = pneg %p92
        %p320 = pneg %p121
        %p321 = pneg %p118
        %s322 = smul.u32 2, %s25
        %p323 = scmp.lt.s32.totalorder %s322, 1
        %s324 = scalar_select %p323, %s322, 1
        %s325 = scalar_lea.vmem %s4, %s324
        %p326 = pneg %p147
        %p327 = pneg %p144
        %p328 = pneg %p173
        %p329 = pneg %p170
        %p330 = pneg %p194
        %p331 = pneg %p191
        %p332 = pneg %p220
        %p333 = pneg %p217
        %p334 = scmp.lt.s32.totalorder %s24, 1
        %s335 = scalar_select %p334, %s24, 1
        %s336 = smul.addr %s335, 8
        %s337 = scalar_lea.vmem %s7, %s336
        %p338 = scmp.lt.s32.totalorder %s24, 1
        %s339 = scalar_select %p338, %s24, 1
        %s340 = smul.addr %s339, 8
        %s341 = scalar_lea.vmem %s0, %s340
        %s342 = smul.u32 2, %s25
        %s343 = smul.u32 2, %s25
        %p344 = scmp.lt.s32.totalorder %s343, 1
        %s345 = scalar_select %p344, %s343, 1
        %s346 = scalar_lea.vmem %s4, %s345
        %s347 = smul.u32 2, %s25
        %s348 = smul.u32 32, %s25
        %p349 = scmp.lt.s32.totalorder %s24, 1
        %s350 = scalar_select %p349, %s24, 1
        %s351 = smul.addr %s350, 8
        %s352 = scalar_lea.vmem %s7, %s351
        %p354 = scmp.eq.s32.totalorder %s25, 0
        // Predicated region
        $region57: #{feedforward.1} parent=47 // pred_check
          %p355 = pneg %p354
        $region58: #{feedforward.1} parent=47 // pred_check_branch
          %357 = sbr.rel (%p355) target = $region60
        $region59: #{feedforward.1} parent=47 // pred_region
          %v358 = vld [vmem:[%s341] sm:$0xff]
          %v359 = vlaneseq
          %v360 = vand.u32 %v359, 127
          %vm361 = vcmp.lt.s32.totalorder %v360, 32
          %362 = vadd.xlane.f32.xlu0 %v358
          %v363 = vpop.xlane.xlu0 %362
          %v364 = vmul.f32 %v363, 0.03125
          %v365 = vsub.f32 %v358, %v364
          %v366 = vsel %vm361, 1, 0
          %vm367 = vcmp.eq.s32.totalorder %v366, 1
          %v368 = vsel %vm367, %v365, 0.0
          %v369 = vmul.f32 %v368, %v368
          %370 = vadd.xlane.f32.xlu0 %v369
          %v371 = vpop.xlane.xlu0 %370
          %v372 = vmul.f32 %v371, 0.03125
          %v373 = vadd.f32 %v372, 1e-06
          %v374 = vrsqrt.pop %v373
          %v375 = vmul.f32 %v368, %v374
          %v376 = vld [vmem:[%s1] sm:$0x1]
          %v378 = vlaneseq
          %v379 = vshrl.u32 %v378, 7
          %v380 = vsub.s32 0, %v379
          %v381 = vrot.slane %v376, %v380
          %v383 = vmul.f32 %v375, %v381
          %v384 = vld [vmem:[%s2] sm:$0x1]
          %v386 = vlaneseq
          %v387 = vshrl.u32 %v386, 7
          %v388 = vsub.s32 0, %v387
          %v389 = vrot.slane %v384, %v388
          %v391 = vadd.f32 %v383, %v389
          %v392 = vpack.c.bf16 %v391, %v391
          %393 = vst [vmem:[#allocation2] sm:$0xf] %v392
          %v394 = vld [vmem:[%s6] sm:$0x1]
          %v396 = vlaneseq
          %v397 = vshrl.u32 %v396, 7
          %v398 = vsub.s32 0, %v397
          %v399 = vrot.slane %v394, %v398
          %401 = vst [vmem:[%s352] sm:$0xff] %v399
        $region60: #{feedforward.1} parent=47 // pred_fallthru
          _
        %v402 = vld [vmem:[#allocation2] sm:$0xf]
        %v403 = vld [vmem:[#allocation3] sm:$0xff]
        %v404 = vld [vmem:[#allocation3 + $0x8] sm:$0xff]
        %v405 = vld [vmem:[#allocation3 + $0x10] sm:$0xff]
        %v406 = vld [vmem:[#allocation3 + $0x18] sm:$0xff]
        %v407 = vld [vmem:[#allocation3 + $0x20] sm:$0xff]
        %v408 = vld [vmem:[#allocation3 + $0x28] sm:$0xff]
        %v409 = vld [vmem:[#allocation3 + $0x30] sm:$0xff]
        %v410 = vld [vmem:[#allocation3 + $0x38] sm:$0xff]
        %v411 = vld [vmem:[#allocation3 + $0x40] sm:$0xff]
        %v412 = vld [vmem:[#allocation3 + $0x48] sm:$0xff]
        %v413 = vld [vmem:[#allocation3 + $0x50] sm:$0xff]
        %v414 = vld [vmem:[#allocation3 + $0x58] sm:$0xff]
        %v415 = vld [vmem:[#allocation3 + $0x60] sm:$0xff]
        %v416 = vld [vmem:[#allocation3 + $0x68] sm:$0xff]
        %v417 = vld [vmem:[#allocation3 + $0x70] sm:$0xff]
        %v418 = vld [vmem:[#allocation3 + $0x78] sm:$0xff]
        %v419 = vld [vmem:[%s346] sm:$0x3]
        %v421 = vlaneseq
        %v422 = vshrl.u32 %v421, 7
        %v423 = vsub.s32 0, %v422
        %v424 = vrot.slane %v419, %v423
        %v425 = vlaneseq
        %v426 = vshrl.u32 %v425, 7
        %v427 = vsub.s32 1, %v426
        %v428 = vrot.slane %v419, %v427
        %v447 = vunpack.c.l.b16 %v403
        %v448 = vunpack.c.h.b16 %v403
        %v449 = vunpack.c.l.b16 %v404
        %v450 = vunpack.c.h.b16 %v404
        %v451 = vunpack.c.l.b16 %v405
        %v452 = vunpack.c.h.b16 %v405
        %v453 = vunpack.c.l.b16 %v406
        %v454 = vunpack.c.h.b16 %v406
        %v455 = vunpack.c.l.b16 %v407
        %v456 = vunpack.c.h.b16 %v407
        %v457 = vunpack.c.l.b16 %v408
        %v458 = vunpack.c.h.b16 %v408
        %v459 = vunpack.c.l.b16 %v409
        %v460 = vunpack.c.h.b16 %v409
        %v461 = vunpack.c.l.b16 %v410
        %v462 = vunpack.c.h.b16 %v410
        %v463 = vunpack.c.l.b16 %v411
        %v464 = vunpack.c.h.b16 %v411
        %v465 = vunpack.c.l.b16 %v412
        %v466 = vunpack.c.h.b16 %v412
        %v467 = vunpack.c.l.b16 %v413
        %v468 = vunpack.c.h.b16 %v413
        %v469 = vunpack.c.l.b16 %v414
        %v470 = vunpack.c.h.b16 %v414
        %v471 = vunpack.c.l.b16 %v415
        %v472 = vunpack.c.h.b16 %v415
        %v473 = vunpack.c.l.b16 %v416
        %v474 = vunpack.c.h.b16 %v416
        %v475 = vunpack.c.l.b16 %v417
        %v476 = vunpack.c.h.b16 %v417
        %v477 = vunpack.c.l.b16 %v418
        %v478 = vunpack.c.h.b16 %v418
        %v479 = vpack.c.b16 %v449, %v447
        %v480 = vpack.c.b16 %v450, %v448
        %v481 = vpack.c.b16 %v453, %v451
        %v482 = vpack.c.b16 %v454, %v452
        %v483 = vpack.c.b16 %v457, %v455
        %v484 = vpack.c.b16 %v458, %v456
        %v485 = vpack.c.b16 %v461, %v459
        %v486 = vpack.c.b16 %v462, %v460
        %v487 = vpack.c.b16 %v465, %v463
        %v488 = vpack.c.b16 %v466, %v464
        %v489 = vpack.c.b16 %v469, %v467
        %v490 = vpack.c.b16 %v470, %v468
        %v491 = vpack.c.b16 %v473, %v471
        %v492 = vpack.c.b16 %v474, %v472
        %v493 = vpack.c.b16 %v477, %v475
        %v494 = vpack.c.b16 %v478, %v476
        %511 = vmatprep.subr.bf16.mxu0 %v480
        %512 = vmatpush1.bf16.msra.mxu0 %v479
        %513 = vmatprep.subr.bf16.mxu0 %v482
        %514 = vmatpush1.bf16.msra.mxu0 %v481
        %515 = vmatprep.subr.bf16.mxu0 %v484
        %516 = vmatpush1.bf16.msra.mxu0 %v483
        %517 = vmatprep.subr.bf16.mxu0 %v486
        %518 = vmatpush1.bf16.msra.mxu0 %v485
        %519 = vmatprep.subr.bf16.mxu0 %v488
        %520 = vmatpush1.bf16.msra.mxu0 %v487
        %521 = vmatprep.subr.bf16.mxu0 %v490
        %522 = vmatpush1.bf16.msra.mxu0 %v489
        %523 = vmatprep.subr.bf16.mxu0 %v492
        %524 = vmatpush1.bf16.msra.mxu0 %v491
        %525 = vmatprep.subr.bf16.mxu0 %v494
        %526 = vmatpush1.bf16.msra.mxu0 %v493
        %527 = vmatprep.subr.bf16.mxu0 0
        %528 = vmatpush1.bf16.msra.mxu0 0
        %529 = vmatprep.subr.bf16.mxu0 0
        %530 = vmatpush1.bf16.msra.mxu0 0
        %531 = vmatprep.subr.bf16.mxu0 0
        %532 = vmatpush1.bf16.msra.mxu0 0
        %533 = vmatprep.subr.bf16.mxu0 0
        %534 = vmatpush1.bf16.msra.mxu0 0
        %535 = vmatprep.subr.bf16.mxu0 0
        %536 = vmatpush1.bf16.msra.mxu0 0
        %537 = vmatprep.subr.bf16.mxu0 0
        %538 = vmatpush1.bf16.msra.mxu0 0
        %539 = vmatprep.subr.bf16.mxu0 0
        %540 = vmatpush1.bf16.msra.mxu0 0
        %541 = vmatprep.subr.bf16.mxu0 0
        %542 = vmatpush1.bf16.msra.mxu0 0
        %543 = vmatprep.mubr.bf16.mxu0 0
        %544 = vmatmul.mubr.bf16.gmra.mrb[0].mxu0 %v402
        %v545 = vpop.f32.mrb[0].mxu0
        %v546 = vadd.f32 %v424, %v545
        %v547 = vpop.f32.mrb[0].mxu0
        %v548 = vadd.f32 %v428, %v547
        %v549 = vpop.f32.mrb[0].mxu0
        %v550 = vpop.f32.mrb[0].mxu0
        %551 = vdwg.mxu0
        %v552 = vmul.f32 %v546, 0.5
        %v553 = vmul.f32 %v548, 0.5
        %v554 = vmul.f32 %v546, %v546
        %v555 = vmul.f32 %v548, %v548
        %v556 = vmul.f32 %v554, %v546
        %v557 = vmul.f32 %v555, %v548
        %v558 = vmul.f32 %v556, 0.044715
        %v559 = vmul.f32 %v557, 0.044715
        %v560 = vadd.f32 %v546, %v558
        %v561 = vadd.f32 %v548, %v559
        %v562 = vmul.f32 %v560, 0.7978846
        %v563 = vmul.f32 %v561, 0.7978846
        %v564 = vtanh.pop %v562
        %v565 = vtanh.pop %v563
        %v566 = vadd.f32 %v564, 1.0
        %v567 = vadd.f32 %v565, 1.0
        %v568 = vmul.f32 %v552, %v566
        %v569 = vmul.f32 %v553, %v567
        %v570 = vld [vmem:[%s352] sm:$0xff]
        %v571 = vpack.c.bf16 %v568, %v568
        %v572 = vpack.c.bf16 %v569, %v569
        %v573 = vld [vmem:[#allocation5] sm:$0xf]
        %v574 = vld [vmem:[#allocation5 + $0x4] sm:$0xf]
        %v575 = vld [vmem:[#allocation5 + $0x8] sm:$0xf]
        %v576 = vld [vmem:[#allocation5 + $0xc] sm:$0xf]
        %v577 = vld [vmem:[#allocation5 + $0x10] sm:$0xf]
        %v578 = vld [vmem:[#allocation5 + $0x14] sm:$0xf]
        %v579 = vld [vmem:[#allocation5 + $0x18] sm:$0xf]
        %v580 = vld [vmem:[#allocation5 + $0x1c] sm:$0xf]
        %v581 = vld [vmem:[#allocation5 + $0x20] sm:$0xf]
        %v582 = vld [vmem:[#allocation5 + $0x24] sm:$0xf]
        %v583 = vld [vmem:[#allocation5 + $0x28] sm:$0xf]
        %v584 = vld [vmem:[#allocation5 + $0x2c] sm:$0xf]
        %v585 = vld [vmem:[#allocation5 + $0x30] sm:$0xf]
        %v586 = vld [vmem:[#allocation5 + $0x34] sm:$0xf]
        %v587 = vld [vmem:[#allocation5 + $0x38] sm:$0xf]
        %v588 = vld [vmem:[#allocation5 + $0x3c] sm:$0xf]
        %v589 = vld [vmem:[#allocation5 + $0x40] sm:$0xf]
        %v590 = vld [vmem:[#allocation5 + $0x44] sm:$0xf]
        %v591 = vld [vmem:[#allocation5 + $0x48] sm:$0xf]
        %v592 = vld [vmem:[#allocation5 + $0x4c] sm:$0xf]
        %v593 = vld [vmem:[#allocation5 + $0x50] sm:$0xf]
        %v594 = vld [vmem:[#allocation5 + $0x54] sm:$0xf]
        %v595 = vld [vmem:[#allocation5 + $0x58] sm:$0xf]
        %v596 = vld [vmem:[#allocation5 + $0x5c] sm:$0xf]
        %v597 = vld [vmem:[#allocation5 + $0x60] sm:$0xf]
        %v598 = vld [vmem:[#allocation5 + $0x64] sm:$0xf]
        %v599 = vld [vmem:[#allocation5 + $0x68] sm:$0xf]
        %v600 = vld [vmem:[#allocation5 + $0x6c] sm:$0xf]
        %v601 = vld [vmem:[#allocation5 + $0x70] sm:$0xf]
        %v602 = vld [vmem:[#allocation5 + $0x74] sm:$0xf]
        %v603 = vld [vmem:[#allocation5 + $0x78] sm:$0xf]
        %v604 = vld [vmem:[#allocation5 + $0x7c] sm:$0xf]
        %v637 = vunpack.c.l.b16 %v573
        %v638 = vunpack.c.l.b16 %v574
        %v639 = vunpack.c.l.b16 %v575
        %v640 = vunpack.c.l.b16 %v576
        %v641 = vunpack.c.l.b16 %v577
        %v642 = vunpack.c.l.b16 %v578
        %v643 = vunpack.c.l.b16 %v579
        %v644 = vunpack.c.l.b16 %v580
        %v645 = vunpack.c.l.b16 %v581
        %v646 = vunpack.c.l.b16 %v582
        %v647 = vunpack.c.l.b16 %v583
        %v648 = vunpack.c.l.b16 %v584
        %v649 = vunpack.c.l.b16 %v585
        %v650 = vunpack.c.l.b16 %v586
        %v651 = vunpack.c.l.b16 %v587
        %v652 = vunpack.c.l.b16 %v588
        %v653 = vunpack.c.l.b16 %v589
        %v654 = vunpack.c.l.b16 %v590
        %v655 = vunpack.c.l.b16 %v591
        %v656 = vunpack.c.l.b16 %v592
        %v657 = vunpack.c.l.b16 %v593
        %v658 = vunpack.c.l.b16 %v594
        %v659 = vunpack.c.l.b16 %v595
        %v660 = vunpack.c.l.b16 %v596
        %v661 = vunpack.c.l.b16 %v597
        %v662 = vunpack.c.l.b16 %v598
        %v663 = vunpack.c.l.b16 %v599
        %v664 = vunpack.c.l.b16 %v600
        %v665 = vunpack.c.l.b16 %v601
        %v666 = vunpack.c.l.b16 %v602
        %v667 = vunpack.c.l.b16 %v603
        %v668 = vunpack.c.l.b16 %v604
        %v669 = vpack.c.b16 %v638, %v637
        %v670 = vpack.c.b16 %v640, %v639
        %v671 = vpack.c.b16 %v642, %v641
        %v672 = vpack.c.b16 %v644, %v643
        %v673 = vpack.c.b16 %v646, %v645
        %v674 = vpack.c.b16 %v648, %v647
        %v675 = vpack.c.b16 %v650, %v649
        %v676 = vpack.c.b16 %v652, %v651
        %v677 = vpack.c.b16 %v654, %v653
        %v678 = vpack.c.b16 %v656, %v655
        %v679 = vpack.c.b16 %v658, %v657
        %v680 = vpack.c.b16 %v660, %v659
        %v681 = vpack.c.b16 %v662, %v661
        %v682 = vpack.c.b16 %v664, %v663
        %v683 = vpack.c.b16 %v666, %v665
        %v684 = vpack.c.b16 %v668, %v667
        %701 = vmatprep.subr.bf16.mxu0 0
        %702 = vmatpush1.bf16.msra.mxu0 %v669
        %703 = vmatprep.subr.bf16.mxu0 0
        %704 = vmatpush1.bf16.msra.mxu0 %v670
        %705 = vmatprep.subr.bf16.mxu0 0
        %706 = vmatpush1.bf16.msra.mxu0 %v671
        %707 = vmatprep.subr.bf16.mxu0 0
        %708 = vmatpush1.bf16.msra.mxu0 %v672
        %709 = vmatprep.subr.bf16.mxu0 0
        %710 = vmatpush1.bf16.msra.mxu0 %v673
        %711 = vmatprep.subr.bf16.mxu0 0
        %712 = vmatpush1.bf16.msra.mxu0 %v674
        %713 = vmatprep.subr.bf16.mxu0 0
        %714 = vmatpush1.bf16.msra.mxu0 %v675
        %715 = vmatprep.subr.bf16.mxu0 0
        %716 = vmatpush1.bf16.msra.mxu0 %v676
        %717 = vmatprep.subr.bf16.mxu0 0
        %718 = vmatpush1.bf16.msra.mxu0 %v677
        %719 = vmatprep.subr.bf16.mxu0 0
        %720 = vmatpush1.bf16.msra.mxu0 %v678
        %721 = vmatprep.subr.bf16.mxu0 0
        %722 = vmatpush1.bf16.msra.mxu0 %v679
        %723 = vmatprep.subr.bf16.mxu0 0
        %724 = vmatpush1.bf16.msra.mxu0 %v680
        %725 = vmatprep.subr.bf16.mxu0 0
        %726 = vmatpush1.bf16.msra.mxu0 %v681
        %727 = vmatprep.subr.bf16.mxu0 0
        %728 = vmatpush1.bf16.msra.mxu0 %v682
        %729 = vmatprep.subr.bf16.mxu0 0
        %730 = vmatpush1.bf16.msra.mxu0 %v683
        %731 = vmatprep.subr.bf16.mxu0 0
        %732 = vmatpush1.bf16.msra.mxu0 %v684
        %733 = vmatprep.mubr.bf16.mxu0 %v572
        %734 = vmatmul.mubr.bf16.gmra.mrb[0].mxu0 %v571
        %v735 = vpop.f32.mrb[0].mxu0
        %v736 = vadd.f32 0.0, %v735
        %v737 = vpop.f32.mrb[0].mxu0
        %v738 = vpop.f32.mrb[0].mxu0
        %v739 = vpop.f32.mrb[0].mxu0
        %740 = vdwg.mxu0
        %v741 = vadd.f32 %v570, %v736
        %742 = vst [vmem:[%s352] sm:$0xff] %v741
        %p743 = scmp.lt.s32.totalorder %s24, 1
        %s744 = scalar_select %p743, %s24, 1
        %s745 = smul.addr %s744, 8
        %s746 = scalar_lea.vmem %s7, %s745
        // Predicated region
        $region61: #{feedforward.1} parent=47 // pred_check
          %p747 = pneg %p217
        $region62: #{feedforward.1} parent=47 // pred_check_branch
          %749 = sbr.rel (%p747) target = $region64
        $region63: #{feedforward.1} parent=47 // pred_region
          _
        $region64: #{feedforward.1} parent=47 // pred_fallthru
          _
      $region48: #{feedforward.1} parent=5 // pred_fallthru
        _
      %p750 = scmp.le.s32.totalorder 2, %s15
      // Predicated region
      $region65: #{feedforward.1} parent=5 // pred_check
        %p751 = pneg %p750
      $region66: #{feedforward.1} parent=5 // pred_check_branch
        %753 = sbr.rel (%p751) target = $region68
      $region67: #{feedforward.1} parent=5 // pred_region
        %s754 = ssub.s32 %s15, 2
        // Predicated region
        $region69: #{feedforward.1} parent=67 // pred_check
          %p755 = pneg %p223
        $region70: #{feedforward.1} parent=67 // pred_check_branch
          %757 = sbr.rel (%p755) target = $region72
        $region71: #{feedforward.1} parent=67 // pred_region
          %p758 = scmp.lt.s32.totalorder %s26, 1
          %s759 = scalar_select %p758, %s26, 1
          %s760 = smul.addr %s759, 8
          %s761 = scalar_lea.vmem %s7, %s760
        $region72: #{feedforward.1} parent=67 // pred_fallthru
          _
      $region68: #{feedforward.1} parent=5 // pred_fallthru
        _
    $region6: #{feedforward.1} parent=1 // loop_footer
      %s19 = sadd.s32 1, %s15
    $region7: #{feedforward.1} parent=1 // loop_footer_branch
      %14 = sbr.rel target = $region3
    $region8: #{feedforward.1} parent=1 // loop_exit
      _
    %762 = vsyncpa [#allocation4], 1
    %s763 = scalar_lea.sflag [#allocation4], 1
    %764 = vsyncpa %s763, 1
    %765 = vsyncpa [#allocation6], 1

</llo_original>
